<compile_context>
chip_gen: v7x
topology: tpu7x:2x2x1
jax: 0.10.0
libtpu: 0.0.40
codegen_flags: <defaults>
</compile_context>

<pallas_src>
import jax
import jax.numpy as jnp
import numpy as np
from jax.experimental import pallas as pl
from jax.experimental.pallas import tpu as pltpu


def _round_up(x, m):
    return ((x + m - 1) // m) * m


def _proj_kernel(x_ref, w1_ref, b1_ref, w2_ref, b2_ref, o_ref, h_ref):
    """Grid = (batch tiles [parallel], out_dim tiles [arbitrary])."""
    # The first layer does not depend on the out_dim tile: compute it once per
    # batch tile (j == 0) and cache SiLU(x @ W1 + b1) in VMEM scratch as bf16.
    @pl.when(pl.program_id(1) == 0)
    def _():
        h = jnp.dot(x_ref[...], w1_ref[...], preferred_element_type=jnp.float32)
        h = h + b1_ref[...]                       # bias add in f32
        h = h.astype(jnp.bfloat16)                # bf16 SiLU (native on v6e/v7x)
        h_ref[...] = h * jax.nn.sigmoid(h)

    # Second layer for the current out_dim tile; f32 accumulate, bf16 SiLU/store.
    y = jnp.dot(h_ref[...], w2_ref[...], preferred_element_type=jnp.float32)
    y = y + b2_ref[...]
    y = y.astype(jnp.bfloat16)
    o_ref[...] = (y * jax.nn.sigmoid(y)).astype(o_ref.dtype)


def init_params(key, image_embed_dim, mid_dim, out_dim):
    """Raw, PyTorch-shaped params: W stored as (in, out) so the kernel does x @ W + b."""
    k1, k2, k3, k4 = jax.random.split(key, 4)
    s1 = 1.0 / np.sqrt(image_embed_dim)
    s2 = 1.0 / np.sqrt(mid_dim)
    w1 = jax.random.uniform(k1, (image_embed_dim, mid_dim), jnp.float32, -s1, s1)
    b1 = jax.random.uniform(k2, (1, mid_dim), jnp.float32, -s1, s1)
    w2 = jax.random.uniform(k3, (mid_dim, out_dim), jnp.float32, -s2, s2)
    b2 = jax.random.uniform(k4, (1, out_dim), jnp.float32, -s2, s2)
    return w1, b1, w2, b2


def prepare_params(params, mid_pad_multiple=128):
    """One-time prep: zero-pad mid_dim to a 128-lane multiple, cast weights to bf16.

    Padding is exact: padded h columns are SiLU(0 + 0) = 0 and the matching w2
    rows are 0, so they contribute nothing to the second matmul.
    """
    w1, b1, w2, b2 = params
    mid_dim = w1.shape[1]
    mid_pad = _round_up(mid_dim, mid_pad_multiple)
    pad = mid_pad - mid_dim
    if pad:
        w1 = jnp.pad(w1, ((0, 0), (0, pad)))
        b1 = jnp.pad(b1, ((0, 0), (0, pad)))
        w2 = jnp.pad(w2, ((0, pad), (0, 0)))
    return (w1.astype(jnp.bfloat16), b1.astype(jnp.float32),
            w2.astype(jnp.bfloat16), b2.astype(jnp.float32))


def deeper_image_projection(image_embeds, prepared_params, num_image_text_embeds,
                            *, block_b=1024, block_n=512):
    """image_embeds: (B, image_embed_dim) -> (B, num_image_text_embeds, cross_attention_dim), bf16."""
    w1, b1, w2, b2 = prepared_params
    B, in_dim = image_embeds.shape
    mid_pad = w1.shape[1]
    out_dim = w2.shape[1]
    cross_attention_dim = out_dim // num_image_text_embeds

    x = image_embeds.astype(jnp.bfloat16)

    # Batch tile: sublane-aligned (multiple of 8), ~ceil(B/2) so there are >= 2
    # parallel grid steps when possible (v7x has 2 TCs), capped at block_b.
    bm = min(block_b, _round_up(max((B + 1) // 2, 1), 8))
    Bk = B
    if B < bm:
        # Tiny batch: pad up to one aligned tile (cheap). Otherwise the ragged
        # last batch tile is handled by Pallas partial blocks (no wrapper pad/slice).
        Bk = bm
        x = jnp.pad(x, ((0, bm - B), (0, 0)))

    bn = min(block_n, out_dim)                  # out_dim tile (multiple of 128 when < out_dim)
    grid = (pl.cdiv(Bk, bm), pl.cdiv(out_dim, bn))

    cost = pl.CostEstimate(
        flops=2 * Bk * (in_dim * mid_pad + mid_pad * out_dim),
        transcendentals=Bk * (mid_pad + out_dim),           # the two sigmoids
        bytes_accessed=(x.size * 2 + w1.size * 2 + w2.size * 2
                        + b1.size * 4 + b2.size * 4 + Bk * out_dim * 2),
    )

    y = pl.pallas_call(
        _proj_kernel,
        out_shape=jax.ShapeDtypeStruct((Bk, out_dim), jnp.bfloat16),
        grid=grid,
        in_specs=[
            pl.BlockSpec((bm, in_dim), lambda i, j: (i, 0)),
            pl.BlockSpec(w1.shape, lambda i, j: (0, 0)),     # resident across the grid
            pl.BlockSpec(b1.shape, lambda i, j: (0, 0)),     # resident across the grid
            pl.BlockSpec((mid_pad, bn), lambda i, j: (0, j)),
            pl.BlockSpec((1, bn), lambda i, j: (0, j)),
        ],
        out_specs=pl.BlockSpec((bm, bn), lambda i, j: (i, j)),
        scratch_shapes=[pltpu.VMEM((bm, mid_pad), jnp.bfloat16)],  # cached SiLU(x@W1+b1)
        compiler_params=pltpu.CompilerParams(
            dimension_semantics=("parallel", "arbitrary")),
        cost_estimate=cost,
    )(x, w1, b1, w2, b2)

    if Bk != B:
        y = y[:B]
    return y.reshape(B, num_image_text_embeds, cross_attention_dim)


def _reference(image_embeds, raw_params, num_image_text_embeds):
    w1, b1, w2, b2 = raw_params
    h = image_embeds @ w1 + b1
    h = h * jax.nn.sigmoid(h)
    y = h @ w2 + b2
    y = y * jax.nn.sigmoid(y)
    B = image_embeds.shape[0]
    return y.reshape(B, num_image_text_embeds, -1)


if __name__ == "__main__":
    # Small shapes consistent with the module's structure.
    batch = 2
    image_embed_dim = 32
    cross_attention_dim = 32
    num_image_text_embeds = 8
    out_dim = num_image_text_embeds * cross_attention_dim           # 256
    mid_dim = (num_image_text_embeds + out_dim) // 2                # 132 -> padded to 256

    key = jax.random.PRNGKey(0)
    k_x, k_p = jax.random.split(key)
    x = jax.random.normal(k_x, (batch, image_embed_dim), jnp.float32)

    raw_params = init_params(k_p, image_embed_dim, mid_dim, out_dim)
    prepared = prepare_params(raw_params)          # pad + bf16, done once

    out = deeper_image_projection(x, prepared, num_image_text_embeds)
    out = jax.block_until_ready(out)

    ref = _reference(x, raw_params, num_image_text_embeds)
    assert out.shape == (batch, num_image_text_embeds, cross_attention_dim)
    # bf16 weights / activations / output on the MXU path -> loose tolerance vs f32 ref.
    np.testing.assert_allclose(np.asarray(out.astype(jnp.float32)),
                               np.asarray(ref), rtol=3e-2, atol=3e-2)

    print("KERNEL_OK")
</pallas_src>

<mosaic_0001>
module attributes {stable_mosaic.version = 11 : i64} {
  func.func @_proj_kernel(%arg0: i32, %arg1: i32, %arg2: memref<8x32xbf16, #tpu.memory_space<vmem>>, %arg3: memref<32x256xbf16, #tpu.memory_space<vmem>>, %arg4: memref<1x256xf32, #tpu.memory_space<vmem>>, %arg5: memref<256x256xbf16, #tpu.memory_space<vmem>>, %arg6: memref<1x256xf32, #tpu.memory_space<vmem>>, %arg7: memref<8x256xbf16, #tpu.memory_space<vmem>>, %arg8: memref<8x256xbf16, #tpu.memory_space<vmem>>) attributes {dimension_semantics = [#tpu.dimension_semantics<parallel>, #tpu.dimension_semantics<arbitrary>], iteration_bounds = array<i64: 1, 1>, scalar_prefetch = 0 : i64, scratch_operands = 1 : i64, tpu.core_type = #tpu.core_type<tc>, window_params = [{transform_indices = @transform_0, window_bounds = array<i64: 8, 32>}, {pipeline_mode = #tpu.pipeline_mode<synchronous>, transform_indices = @transform_1, window_bounds = array<i64: 32, 256>}, {pipeline_mode = #tpu.pipeline_mode<synchronous>, transform_indices = @transform_2, window_bounds = array<i64: 1, 256>}, {transform_indices = @transform_3, window_bounds = array<i64: 256, 256>}, {transform_indices = @transform_4, window_bounds = array<i64: 1, 256>}, {transform_indices = @transform_5, window_bounds = array<i64: 8, 256>}]} {
    %c0_i32 = arith.constant 0 : i32
    %0 = arith.cmpi eq, %arg1, %c0_i32 : i32
    %1 = arith.extui %0 : i1 to i32
    %c0_i32_0 = arith.constant 0 : i32
    %2 = arith.cmpi ne, %1, %c0_i32_0 : i32
    scf.if %2 {
      %c0_9 = arith.constant 0 : index
      %c0_10 = arith.constant 0 : index
      %17 = vector.load %arg2[%c0_9, %c0_10] : memref<8x32xbf16, #tpu.memory_space<vmem>>, vector<8x32xbf16>
      %c0_11 = arith.constant 0 : index
      %c0_12 = arith.constant 0 : index
      %18 = vector.load %arg3[%c0_11, %c0_12] : memref<32x256xbf16, #tpu.memory_space<vmem>>, vector<32x256xbf16>
      %cst_13 = arith.constant dense<0.000000e+00> : vector<8x256xf32>
      %19 = tpu.matmul %17, %18, %cst_13 {dimension_numbers = #tpu.dot_dimension_numbers<[1], [0], [0], [1], [0, 0, 1, 1], [], []>} : vector<8x32xbf16>, vector<32x256xbf16>, vector<8x256xf32> -> vector<8x256xf32>
      %c0_14 = arith.constant 0 : index
      %c0_15 = arith.constant 0 : index
      %20 = vector.load %arg4[%c0_14, %c0_15] : memref<1x256xf32, #tpu.memory_space<vmem>>, vector<1x256xf32>
      %21 = vector.broadcast %20 : vector<1x256xf32> to vector<8x256xf32>
      %22 = arith.addf %19, %21 : vector<8x256xf32>
      %23 = arith.truncf %22 : vector<8x256xf32> to vector<8x256xbf16>
      %24 = arith.negf %23 : vector<8x256xbf16>
      %25 = math.exp %24 : vector<8x256xbf16>
      %cst_16 = arith.constant 1.000000e+00 : bf16
      %26 = vector.broadcast %cst_16 : bf16 to vector<8x256xbf16>
      %27 = arith.addf %26, %25 : vector<8x256xbf16>
      %28 = arith.divf %26, %27 : vector<8x256xbf16>
      %29 = arith.mulf %23, %28 : vector<8x256xbf16>
      %c0_17 = arith.constant 0 : index
      %c0_18 = arith.constant 0 : index
      %30 = vector.load %arg8[%c0_17, %c0_18] : memref<8x256xbf16, #tpu.memory_space<vmem>>, vector<8x256xbf16>
      tpu.vector_store %arg8[%c0_17, %c0_18], %29 {strides = array<i32>} : memref<8x256xbf16, #tpu.memory_space<vmem>>, vector<8x256xbf16>,
    } else {
    }
    %c0 = arith.constant 0 : index
    %c0_1 = arith.constant 0 : index
    %3 = vector.load %arg8[%c0, %c0_1] : memref<8x256xbf16, #tpu.memory_space<vmem>>, vector<8x256xbf16>
    %c0_2 = arith.constant 0 : index
    %c0_3 = arith.constant 0 : index
    %4 = vector.load %arg5[%c0_2, %c0_3] : memref<256x256xbf16, #tpu.memory_space<vmem>>, vector<256x256xbf16>
    %cst = arith.constant dense<0.000000e+00> : vector<8x256xf32>
    %5 = tpu.matmul %3, %4, %cst {dimension_numbers = #tpu.dot_dimension_numbers<[1], [0], [0], [1], [0, 0, 1, 1], [], []>} : vector<8x256xbf16>, vector<256x256xbf16>, vector<8x256xf32> -> vector<8x256xf32>
    %c0_4 = arith.constant 0 : index
    %c0_5 = arith.constant 0 : index
    %6 = vector.load %arg6[%c0_4, %c0_5] : memref<1x256xf32, #tpu.memory_space<vmem>>, vector<1x256xf32>
    %7 = vector.broadcast %6 : vector<1x256xf32> to vector<8x256xf32>
    %8 = arith.addf %5, %7 : vector<8x256xf32>
    %9 = arith.truncf %8 : vector<8x256xf32> to vector<8x256xbf16>
    %10 = arith.negf %9 : vector<8x256xbf16>
    %11 = math.exp %10 : vector<8x256xbf16>
    %cst_6 = arith.constant 1.000000e+00 : bf16
    %12 = vector.broadcast %cst_6 : bf16 to vector<8x256xbf16>
    %13 = arith.addf %12, %11 : vector<8x256xbf16>
    %14 = arith.divf %12, %13 : vector<8x256xbf16>
    %15 = arith.mulf %9, %14 : vector<8x256xbf16>
    %c0_7 = arith.constant 0 : index
    %c0_8 = arith.constant 0 : index
    %16 = vector.load %arg7[%c0_7, %c0_8] : memref<8x256xbf16, #tpu.memory_space<vmem>>, vector<8x256xbf16>
    tpu.vector_store %arg7[%c0_7, %c0_8], %15 {strides = array<i32>} : memref<8x256xbf16, #tpu.memory_space<vmem>>, vector<8x256xbf16>,
    return
  }
  func.func @transform_0(%arg0: i32, %arg1: i32) -> (i32, i32) {
    %c0_i32 = arith.constant 0 : i32
    %c0_i32_0 = arith.constant 0 : i32
    return %arg0, %c0_i32 : i32, i32
  }
  func.func @transform_1(%arg0: i32, %arg1: i32) -> (i32, i32) {
    %c0_i32 = arith.constant 0 : i32
    %c0_i32_0 = arith.constant 0 : i32
    %c0_i32_1 = arith.constant 0 : i32
    return %c0_i32, %c0_i32_0 : i32, i32
  }
  func.func @transform_2(%arg0: i32, %arg1: i32) -> (i32, i32) {
    %c0_i32 = arith.constant 0 : i32
    %c0_i32_0 = arith.constant 0 : i32
    %c0_i32_1 = arith.constant 0 : i32
    return %c0_i32, %c0_i32_0 : i32, i32
  }
  func.func @transform_3(%arg0: i32, %arg1: i32) -> (i32, i32) {
    %c0_i32 = arith.constant 0 : i32
    %c0_i32_0 = arith.constant 0 : i32
    return %c0_i32, %arg1 : i32, i32
  }
  func.func @transform_4(%arg0: i32, %arg1: i32) -> (i32, i32) {
    %c0_i32 = arith.constant 0 : i32
    %c0_i32_0 = arith.constant 0 : i32
    return %c0_i32, %arg1 : i32, i32
  }
  func.func @transform_5(%arg0: i32, %arg1: i32) -> (i32, i32) {
    %c0_i32 = arith.constant 0 : i32
    return %arg0, %arg1 : i32, i32
  }
}

</mosaic_0001>

<llo_original>
// kernel: tpu_custom_call.1
$region0: #{tpu_custom_call.1}
  #allocation0 [shape = 'u32[]', space=smem, size = 0x4, offset = 0x4, fixed_abs, tag = 'smem constant byte address 0x4 - core index']
  #allocation1 [shape = 'u32[144,128]{1,0:T(1,128)}', space=vmem, size = 0x12000, scoped, tag = 'internal scratch']
  #allocation2 [shape = 'bf16[8,256]{1,0:T(8,128)(2,1)}', space=vmem, size = 0x1000, scoped, tag = 'scratch operand']
  %s0 = inlined_call_operand.hbm [shape: bf16[8,32], index: 0, kind: input, shape index: {}]
  %s1 = inlined_call_operand.hbm [shape: bf16[32,256], index: 1, kind: input, shape index: {}]
  %s2 = inlined_call_operand.vmem [shape: f32[1,256], index: 2, kind: input, shape index: {}]
  %s3 = inlined_call_operand.hbm [shape: bf16[256,256], index: 3, kind: input, shape index: {}]
  %s4 = inlined_call_operand.vmem [shape: f32[1,256], index: 4, kind: input, shape index: {}]
  %s5 = inlined_call_operand.hbm [shape: bf16[8,256], index: 5, kind: output, shape index: {}]
  %s6 = sld [smem:[#allocation0]]
  $region46: #{tpu_custom_call.1} parent=0
    _
  %s8 = ssub.s32 1, %s6
  %s9 = scalar_select 0, %s8, %s6
  $region1: #{tpu_custom_call.1} parent=0
    #allocation3 [shape = 'u8[2048]{0}', space=vmem, size = 0x800, scoped, tag = 'input window, operand 0, single buffered']
    #allocation4 [shape = 's32[1]{0}', space=sflag, size = 0x4, scoped, tag = 'scoped memory for tpu_custom_call.1']
    #allocation5 [shape = 's32[1]{0}', space=sflag, size = 0x4, scoped, tag = 'scoped memory for tpu_custom_call.1']
    #allocation6 [shape = 'u8[16384]{0}', space=vmem, size = 0x4000, scoped, tag = 'input window, operand 1, single buffered']
    #allocation7 [shape = 's32[1]{0}', space=sflag, size = 0x4, scoped, tag = 'scoped memory for tpu_custom_call.1']
    #allocation8 [shape = 'u8[131072]{0}', space=vmem, size = 0x20000, scoped, tag = 'input window, operand 3, single buffered']
    #allocation9 [shape = 'u8[4096]{0}', space=vmem, size = 0x1000, scoped, tag = 'output window, operand 0, single buffered']
    %10 = vsyncpa [#allocation4], 0
    %11 = vsyncpa [#allocation7], 0
    %12 = vsyncpa [#allocation5], 0
    // Predicated region
    $region2: #{tpu_custom_call.1} parent=1 // pred_check
      _
    $region3: #{tpu_custom_call.1} parent=1 // pred_check_branch
      %14 = sbr.rel (0) target = $region5
    $region4: #{tpu_custom_call.1} parent=1 // pred_region
      %s16 = ssub.s32 64, 64
      %17 = vsyncadd [#allocation4], %s16
      %s19 = sshll.u32 [#allocation3], 4
      %s20 = int_to_ptr.vmem [resolvable:$true] %s19
      %22 = dma.hbm_to_vmem [thread:$0]  %s0, 64, %s20, [#allocation4]
    $region5: #{tpu_custom_call.1} parent=1 // pred_fallthru
      _
    // Predicated region
    $region6: #{tpu_custom_call.1} parent=1 // pred_check
      _
    $region7: #{tpu_custom_call.1} parent=1 // pred_check_branch
      %24 = sbr.rel (0) target = $region9
    $region8: #{tpu_custom_call.1} parent=1 // pred_region
      %s26 = ssub.s32 512, 512
      %27 = vsyncadd [#allocation7], %s26
      %s28 = sshll.u32 [#allocation6], 4
      %s29 = int_to_ptr.vmem [resolvable:$true] %s28
      %34 = dma.hbm_to_vmem [thread:$0]  %s1, 512, %s29, [#allocation7], 128, 128, 8
    $region9: #{tpu_custom_call.1} parent=1 // pred_fallthru
      _
    // Predicated region
    $region10: #{tpu_custom_call.1} parent=1 // pred_check
      _
    $region11: #{tpu_custom_call.1} parent=1 // pred_check_branch
      %36 = sbr.rel (0) target = $region13
    $region12: #{tpu_custom_call.1} parent=1 // pred_region
      _
    $region13: #{tpu_custom_call.1} parent=1 // pred_fallthru
      _
    // Predicated region
    $region14: #{tpu_custom_call.1} parent=1 // pred_check
      _
    $region15: #{tpu_custom_call.1} parent=1 // pred_check_branch
      %38 = sbr.rel (0) target = $region17
    $region16: #{tpu_custom_call.1} parent=1 // pred_region
      %s40 = ssub.s32 4096, 4096
      %41 = vsyncadd [#allocation7], %s40
      %s42 = sshll.u32 [#allocation8], 4
      %s43 = int_to_ptr.vmem [resolvable:$true] %s42
      %48 = dma.hbm_to_vmem [thread:$0]  %s3, 4096, %s43, [#allocation7], 128, 128, 8
    $region17: #{tpu_custom_call.1} parent=1 // pred_fallthru
      _
    // Predicated region
    $region18: #{tpu_custom_call.1} parent=1 // pred_check
      _
    $region19: #{tpu_custom_call.1} parent=1 // pred_check_branch
      %50 = sbr.rel (0) target = $region21
    $region20: #{tpu_custom_call.1} parent=1 // pred_region
      _
    $region21: #{tpu_custom_call.1} parent=1 // pred_fallthru
      _
    // Predicated region
    $region22: #{tpu_custom_call.1} parent=1 // pred_check
      _
    $region23: #{tpu_custom_call.1} parent=1 // pred_check_branch
      %52 = sbr.rel (0) target = $region25
    $region24: #{tpu_custom_call.1} parent=1 // pred_region
      %53 = dma.done [#allocation4], 64
    $region25: #{tpu_custom_call.1} parent=1 // pred_fallthru
      _
    // Predicated region
    $region26: #{tpu_custom_call.1} parent=1 // pred_check
      _
    $region27: #{tpu_custom_call.1} parent=1 // pred_check_branch
      %55 = sbr.rel (0) target = $region29
    $region28: #{tpu_custom_call.1} parent=1 // pred_region
      %56 = dma.done [#allocation7], 512
    $region29: #{tpu_custom_call.1} parent=1 // pred_fallthru
      _
    // Predicated region
    $region30: #{tpu_custom_call.1} parent=1 // pred_check
      _
    $region31: #{tpu_custom_call.1} parent=1 // pred_check_branch
      %58 = sbr.rel (0) target = $region33
    $region32: #{tpu_custom_call.1} parent=1 // pred_region
      %59 = dma.done [#allocation7], 4096
    $region33: #{tpu_custom_call.1} parent=1 // pred_fallthru
      _
    %p62 = scmp.eq.s32.totalorder 0, 0
    // Predicated region
    $region34: #{tpu_custom_call.1} parent=1 // pred_check
      %p63 = pneg %p62
    $region35: #{tpu_custom_call.1} parent=1 // pred_check_branch
      %65 = sbr.rel (%p63) target = $region37
    $region36: #{tpu_custom_call.1} parent=1 // pred_region
      %v66 = vld [vmem:[#allocation3] sm:$0xf]
      %v67 = vld [vmem:[#allocation6] sm:$0xff]
      %v68 = vld [vmem:[#allocation6 + $0x8] sm:$0xff]
      %v69 = vld [vmem:[#allocation6 + $0x10] sm:$0xff]
      %v70 = vld [vmem:[#allocation6 + $0x18] sm:$0xff]
      %v71 = vld [vmem:[%s2] sm:$0x3]
      %v73 = vlaneseq
      %v74 = vshrl.u32 %v73, 7
      %v75 = vsub.s32 0, %v74
      %v76 = vrot.slane %v71, %v75
      %v77 = vlaneseq
      %v78 = vshrl.u32 %v77, 7
      %v79 = vsub.s32 1, %v78
      %v80 = vrot.slane %v71, %v79
      %v87 = vunpack.c.l.b16 %v67
      %v88 = vunpack.c.h.b16 %v67
      %v89 = vunpack.c.l.b16 %v68
      %v90 = vunpack.c.h.b16 %v68
      %v91 = vunpack.c.l.b16 %v69
      %v92 = vunpack.c.h.b16 %v69
      %v93 = vunpack.c.l.b16 %v70
      %v94 = vunpack.c.h.b16 %v70
      %v95 = vpack.c.b16 %v89, %v87
      %v96 = vpack.c.b16 %v90, %v88
      %v97 = vpack.c.b16 %v93, %v91
      %v98 = vpack.c.b16 %v94, %v92
      %vm103 = vcmask 261120
      %v105 = vsel %vm103, %v66, 0
      %107 = vmatprep.subr.bf16.mxu0 %v96
      %108 = vmatpush1.bf16.msra.mxu0 %v95
      %109 = vmatprep.subr.bf16.mxu0 %v98
      %110 = vmatpush1.bf16.msra.mxu0 %v97
      %111 = vmatprep.subr.bf16.mxu0 0
      %112 = vmatpush1.bf16.msra.mxu0 0
      %113 = vmatprep.subr.bf16.mxu0 0
      %114 = vmatpush1.bf16.msra.mxu0 0
      %115 = vmatprep.subr.bf16.mxu0 0
      %116 = vmatpush1.bf16.msra.mxu0 0
      %117 = vmatprep.subr.bf16.mxu0 0
      %118 = vmatpush1.bf16.msra.mxu0 0
      %119 = vmatprep.subr.bf16.mxu0 0
      %120 = vmatpush1.bf16.msra.mxu0 0
      %121 = vmatprep.subr.bf16.mxu0 0
      %122 = vmatpush1.bf16.msra.mxu0 0
      %123 = vmatprep.subr.bf16.mxu0 0
      %124 = vmatpush1.bf16.msra.mxu0 0
      %125 = vmatprep.subr.bf16.mxu0 0
      %126 = vmatpush1.bf16.msra.mxu0 0
      %127 = vmatprep.subr.bf16.mxu0 0
      %128 = vmatpush1.bf16.msra.mxu0 0
      %129 = vmatprep.subr.bf16.mxu0 0
      %130 = vmatpush1.bf16.msra.mxu0 0
      %131 = vmatprep.subr.bf16.mxu0 0
      %132 = vmatpush1.bf16.msra.mxu0 0
      %133 = vmatprep.subr.bf16.mxu0 0
      %134 = vmatpush1.bf16.msra.mxu0 0
      %135 = vmatprep.subr.bf16.mxu0 0
      %136 = vmatpush1.bf16.msra.mxu0 0
      %137 = vmatprep.subr.bf16.mxu0 0
      %138 = vmatpush1.bf16.msra.mxu0 0
      %139 = vmatprep.mubr.bf16.mxu0 0
      %140 = vmatmul.mubr.bf16.gmra.mrb[0].mxu0 %v105
      %v141 = vpop.f32.mrb[0].mxu0
      %v142 = vadd.f32 %v76, %v141
      %v143 = vpop.f32.mrb[0].mxu0
      %v144 = vadd.f32 %v80, %v143
      %v145 = vpop.f32.mrb[0].mxu0
      %v146 = vpop.f32.mrb[0].mxu0
      %147 = vdwg.mxu0
      %v148 = vpack.c.bf16 %v142, %v142
      %v149 = vpack.c.bf16 %v144, %v144
      %v150 = vxor.u32 %v148, 2147516416
      %v151 = vxor.u32 %v149, 2147516416
      %v153 = vmul.bf16 %v150, 1069105081
      %v154 = vpow.bf16.pop %v153
      %v156 = vmul.bf16 %v151, 1069105081
      %v157 = vpow.bf16.pop %v156
      %v158 = vadd.bf16 %v154, 1065369472
      %v159 = vadd.bf16 %v157, 1065369472
      %v160 = vrcp.bf16.pop %v158
      %v161 = vmul.bf16 1065369472, %v160
      %v162 = vrcp.bf16.pop %v159
      %v163 = vmul.bf16 1065369472, %v162
      %v164 = vmul.bf16 %v148, %v161
      %v165 = vmul.bf16 %v149, %v163
      %v168 = vunpack.c.l.b16 %v164
      %v169 = vunpack.c.l.b16 %v165
      %v170 = vpack.c.b16 %v169, %v168
      %172 = vst [vmem:[#allocation2] sm:$0xff] %v170
    $region37: #{tpu_custom_call.1} parent=1 // pred_fallthru
      _
    %v173 = vld [vmem:[#allocation2] sm:$0xff]
    %v174 = vld [vmem:[#allocation8] sm:$0xff]
    %v175 = vld [vmem:[#allocation8 + $0x8] sm:$0xff]
    %v176 = vld [vmem:[#allocation8 + $0x10] sm:$0xff]
    %v177 = vld [vmem:[#allocation8 + $0x18] sm:$0xff]
    %v178 = vld [vmem:[#allocation8 + $0x20] sm:$0xff]
    %v179 = vld [vmem:[#allocation8 + $0x28] sm:$0xff]
    %v180 = vld [vmem:[#allocation8 + $0x30] sm:$0xff]
    %v181 = vld [vmem:[#allocation8 + $0x38] sm:$0xff]
    %v182 = vld [vmem:[#allocation8 + $0x40] sm:$0xff]
    %v183 = vld [vmem:[#allocation8 + $0x48] sm:$0xff]
    %v184 = vld [vmem:[#allocation8 + $0x50] sm:$0xff]
    %v185 = vld [vmem:[#allocation8 + $0x58] sm:$0xff]
    %v186 = vld [vmem:[#allocation8 + $0x60] sm:$0xff]
    %v187 = vld [vmem:[#allocation8 + $0x68] sm:$0xff]
    %v188 = vld [vmem:[#allocation8 + $0x70] sm:$0xff]
    %v189 = vld [vmem:[#allocation8 + $0x78] sm:$0xff]
    %v190 = vld [vmem:[#allocation8 + $0x80] sm:$0xff]
    %v191 = vld [vmem:[#allocation8 + $0x88] sm:$0xff]
    %v192 = vld [vmem:[#allocation8 + $0x90] sm:$0xff]
    %v193 = vld [vmem:[#allocation8 + $0x98] sm:$0xff]
    %v194 = vld [vmem:[#allocation8 + $0xa0] sm:$0xff]
    %v195 = vld [vmem:[#allocation8 + $0xa8] sm:$0xff]
    %v196 = vld [vmem:[#allocation8 + $0xb0] sm:$0xff]
    %v197 = vld [vmem:[#allocation8 + $0xb8] sm:$0xff]
    %v198 = vld [vmem:[#allocation8 + $0xc0] sm:$0xff]
    %v199 = vld [vmem:[#allocation8 + $0xc8] sm:$0xff]
    %v200 = vld [vmem:[#allocation8 + $0xd0] sm:$0xff]
    %v201 = vld [vmem:[#allocation8 + $0xd8] sm:$0xff]
    %v202 = vld [vmem:[#allocation8 + $0xe0] sm:$0xff]
    %v203 = vld [vmem:[#allocation8 + $0xe8] sm:$0xff]
    %v204 = vld [vmem:[#allocation8 + $0xf0] sm:$0xff]
    %v205 = vld [vmem:[#allocation8 + $0xf8] sm:$0xff]
    %v206 = vld [vmem:[%s4] sm:$0x3]
    %v208 = vlaneseq
    %v209 = vshrl.u32 %v208, 7
    %v210 = vsub.s32 0, %v209
    %v211 = vrot.slane %v206, %v210
    %v212 = vlaneseq
    %v213 = vshrl.u32 %v212, 7
    %v214 = vsub.s32 1, %v213
    %v215 = vrot.slane %v206, %v214
    %v219 = vunpack.c.l.b16 %v173
    %v220 = vunpack.c.h.b16 %v173
    %v221 = vpack.c.b16 %v219, %v219
    %v222 = vpack.c.b16 %v220, %v220
    %v257 = vunpack.c.l.b16 %v174
    %v258 = vunpack.c.h.b16 %v174
    %v259 = vunpack.c.l.b16 %v175
    %v260 = vunpack.c.h.b16 %v175
    %v261 = vunpack.c.l.b16 %v176
    %v262 = vunpack.c.h.b16 %v176
    %v263 = vunpack.c.l.b16 %v177
    %v264 = vunpack.c.h.b16 %v177
    %v265 = vunpack.c.l.b16 %v178
    %v266 = vunpack.c.h.b16 %v178
    %v267 = vunpack.c.l.b16 %v179
    %v268 = vunpack.c.h.b16 %v179
    %v269 = vunpack.c.l.b16 %v180
    %v270 = vunpack.c.h.b16 %v180
    %v271 = vunpack.c.l.b16 %v181
    %v272 = vunpack.c.h.b16 %v181
    %v273 = vunpack.c.l.b16 %v182
    %v274 = vunpack.c.h.b16 %v182
    %v275 = vunpack.c.l.b16 %v183
    %v276 = vunpack.c.h.b16 %v183
    %v277 = vunpack.c.l.b16 %v184
    %v278 = vunpack.c.h.b16 %v184
    %v279 = vunpack.c.l.b16 %v185
    %v280 = vunpack.c.h.b16 %v185
    %v281 = vunpack.c.l.b16 %v186
    %v282 = vunpack.c.h.b16 %v186
    %v283 = vunpack.c.l.b16 %v187
    %v284 = vunpack.c.h.b16 %v187
    %v285 = vunpack.c.l.b16 %v188
    %v286 = vunpack.c.h.b16 %v188
    %v287 = vunpack.c.l.b16 %v189
    %v288 = vunpack.c.h.b16 %v189
    %v289 = vunpack.c.l.b16 %v190
    %v290 = vunpack.c.h.b16 %v190
    %v291 = vunpack.c.l.b16 %v191
    %v292 = vunpack.c.h.b16 %v191
    %v293 = vunpack.c.l.b16 %v192
    %v294 = vunpack.c.h.b16 %v192
    %v295 = vunpack.c.l.b16 %v193
    %v296 = vunpack.c.h.b16 %v193
    %v297 = vunpack.c.l.b16 %v194
    %v298 = vunpack.c.h.b16 %v194
    %v299 = vunpack.c.l.b16 %v195
    %v300 = vunpack.c.h.b16 %v195
    %v301 = vunpack.c.l.b16 %v196
    %v302 = vunpack.c.h.b16 %v196
    %v303 = vunpack.c.l.b16 %v197
    %v304 = vunpack.c.h.b16 %v197
    %v305 = vunpack.c.l.b16 %v198
    %v306 = vunpack.c.h.b16 %v198
    %v307 = vunpack.c.l.b16 %v199
    %v308 = vunpack.c.h.b16 %v199
    %v309 = vunpack.c.l.b16 %v200
    %v310 = vunpack.c.h.b16 %v200
    %v311 = vunpack.c.l.b16 %v201
    %v312 = vunpack.c.h.b16 %v201
    %v313 = vunpack.c.l.b16 %v202
    %v314 = vunpack.c.h.b16 %v202
    %v315 = vunpack.c.l.b16 %v203
    %v316 = vunpack.c.h.b16 %v203
    %v317 = vunpack.c.l.b16 %v204
    %v318 = vunpack.c.h.b16 %v204
    %v319 = vunpack.c.l.b16 %v205
    %v320 = vunpack.c.h.b16 %v205
    %v321 = vpack.c.b16 %v259, %v257
    %v322 = vpack.c.b16 %v260, %v258
    %v323 = vpack.c.b16 %v263, %v261
    %v324 = vpack.c.b16 %v264, %v262
    %v325 = vpack.c.b16 %v267, %v265
    %v326 = vpack.c.b16 %v268, %v266
    %v327 = vpack.c.b16 %v271, %v269
    %v328 = vpack.c.b16 %v272, %v270
    %v329 = vpack.c.b16 %v275, %v273
    %v330 = vpack.c.b16 %v276, %v274
    %v331 = vpack.c.b16 %v279, %v277
    %v332 = vpack.c.b16 %v280, %v278
    %v333 = vpack.c.b16 %v283, %v281
    %v334 = vpack.c.b16 %v284, %v282
    %v335 = vpack.c.b16 %v287, %v285
    %v336 = vpack.c.b16 %v288, %v286
    %v337 = vpack.c.b16 %v291, %v289
    %v338 = vpack.c.b16 %v292, %v290
    %v339 = vpack.c.b16 %v295, %v293
    %v340 = vpack.c.b16 %v296, %v294
    %v341 = vpack.c.b16 %v299, %v297
    %v342 = vpack.c.b16 %v300, %v298
    %v343 = vpack.c.b16 %v303, %v301
    %v344 = vpack.c.b16 %v304, %v302
    %v345 = vpack.c.b16 %v307, %v305
    %v346 = vpack.c.b16 %v308, %v306
    %v347 = vpack.c.b16 %v311, %v309
    %v348 = vpack.c.b16 %v312, %v310
    %v349 = vpack.c.b16 %v315, %v313
    %v350 = vpack.c.b16 %v316, %v314
    %v351 = vpack.c.b16 %v319, %v317
    %v352 = vpack.c.b16 %v320, %v318
    %385 = vmatprep.subr.bf16.mxu0 %v322
    %386 = vmatpush1.bf16.msra.mxu0 %v321
    %387 = vmatprep.subr.bf16.mxu0 %v324
    %388 = vmatpush1.bf16.msra.mxu0 %v323
    %389 = vmatprep.subr.bf16.mxu0 %v326
    %390 = vmatpush1.bf16.msra.mxu0 %v325
    %391 = vmatprep.subr.bf16.mxu0 %v328
    %392 = vmatpush1.bf16.msra.mxu0 %v327
    %393 = vmatprep.subr.bf16.mxu0 %v330
    %394 = vmatpush1.bf16.msra.mxu0 %v329
    %395 = vmatprep.subr.bf16.mxu0 %v332
    %396 = vmatpush1.bf16.msra.mxu0 %v331
    %397 = vmatprep.subr.bf16.mxu0 %v334
    %398 = vmatpush1.bf16.msra.mxu0 %v333
    %399 = vmatprep.subr.bf16.mxu0 %v336
    %400 = vmatpush1.bf16.msra.mxu0 %v335
    %401 = vmatprep.subr.bf16.mxu0 %v338
    %402 = vmatpush1.bf16.msra.mxu0 %v337
    %403 = vmatprep.subr.bf16.mxu0 %v340
    %404 = vmatpush1.bf16.msra.mxu0 %v339
    %405 = vmatprep.subr.bf16.mxu0 %v342
    %406 = vmatpush1.bf16.msra.mxu0 %v341
    %407 = vmatprep.subr.bf16.mxu0 %v344
    %408 = vmatpush1.bf16.msra.mxu0 %v343
    %409 = vmatprep.subr.bf16.mxu0 %v346
    %410 = vmatpush1.bf16.msra.mxu0 %v345
    %411 = vmatprep.subr.bf16.mxu0 %v348
    %412 = vmatpush1.bf16.msra.mxu0 %v347
    %413 = vmatprep.subr.bf16.mxu0 %v350
    %414 = vmatpush1.bf16.msra.mxu0 %v349
    %415 = vmatprep.subr.bf16.mxu0 %v352
    %416 = vmatpush1.bf16.msra.mxu0 %v351
    %417 = vmatprep.mubr.bf16.mxu0 %v222
    %418 = vmatmul.mubr.bf16.gmra.mrb[0].mxu0 %v221
    %v419 = vpop.f32.mrb[0].mxu0
    %v420 = vadd.f32 %v211, %v419
    %v421 = vpop.f32.mrb[0].mxu0
    %v422 = vadd.f32 %v215, %v421
    %v423 = vpop.f32.mrb[0].mxu0
    %v424 = vpop.f32.mrb[0].mxu0
    %425 = vdwg.mxu0
    %v426 = vpack.c.bf16 %v420, %v420
    %v427 = vpack.c.bf16 %v422, %v422
    %v428 = vxor.u32 %v426, 2147516416
    %v429 = vxor.u32 %v427, 2147516416
    %v431 = vmul.bf16 %v428, 1069105081
    %v432 = vpow.bf16.pop %v431
    %v434 = vmul.bf16 %v429, 1069105081
    %v435 = vpow.bf16.pop %v434
    %v436 = vadd.bf16 %v432, 1065369472
    %v437 = vadd.bf16 %v435, 1065369472
    %v438 = vrcp.bf16.pop %v436
    %v439 = vmul.bf16 1065369472, %v438
    %v440 = vrcp.bf16.pop %v437
    %v441 = vmul.bf16 1065369472, %v440
    %v442 = vmul.bf16 %v426, %v439
    %v443 = vmul.bf16 %v427, %v441
    %v446 = vunpack.c.l.b16 %v442
    %v447 = vunpack.c.l.b16 %v443
    %v448 = vpack.c.b16 %v447, %v446
    %450 = vst [vmem:[#allocation9] sm:$0xff] %v448
    // Predicated region
    $region38: #{tpu_custom_call.1} parent=1 // pred_check
      _
    $region39: #{tpu_custom_call.1} parent=1 // pred_check_branch
      %452 = sbr.rel (0) target = $region41
    $region40: #{tpu_custom_call.1} parent=1 // pred_region
      %s454 = ssub.s32 128, 128
      %455 = vsyncadd [#allocation5], %s454
      %s457 = sshll.u32 [#allocation9], 4
      %s458 = int_to_ptr.vmem [resolvable:$true] %s457
      %460 = dma.vmem_to_hbm [thread:$0]  %s458, 128, %s5, [#allocation5]
    $region41: #{tpu_custom_call.1} parent=1 // pred_fallthru
      _
    // Predicated region
    $region42: #{tpu_custom_call.1} parent=1 // pred_check
      _
    $region43: #{tpu_custom_call.1} parent=1 // pred_check_branch
      %462 = sbr.rel (0) target = $region45
    $region44: #{tpu_custom_call.1} parent=1 // pred_region
      %463 = dma.done [#allocation5], 128
    $region45: #{tpu_custom_call.1} parent=1 // pred_fallthru
      _
    %464 = vsyncpa [#allocation4], 1
    %465 = vsyncpa [#allocation7], 1
    %466 = vsyncpa [#allocation5], 1

</llo_original>
